<compile_context>
chip_gen: v7x
topology: tpu7x:2x2x1
jax: 0.10.0
libtpu: 0.0.40
codegen_flags: <defaults>
</compile_context>

<pallas_src>
import functools

import jax
import jax.numpy as jnp
from jax.experimental import pallas as pl
from jax.experimental.pallas import tpu as pltpu

EMB = 64   # emb_dims of the GNN
K = 12     # knn(k=12)


# ----------------------------- Pallas kernel ------------------------------ #
def _propagate_kernel(ynn_ref, y0_ref, w2_ref, b2_ref, w3_ref, b3_ref,
                      out_ref, *, k):
    # ynn_ref : (1, K, T, E1) bf16  gathered, BN-folded, pre-projected
    #                               neighbor feats  (y = x @ (W1 * s1))
    # y0_ref  : (1, T, E1)    bf16  pre-projected centers with the BN shift
    #                               already folded in  (y0 = x0@(W1*s1) - t1)
    # w2/b2   : conv2 (bias);  w3/b3 : final 1x1 Conv1d (bias)
    # out_ref : (1, T, E3)    f32
    _, _, tn, e1 = ynn_ref.shape
    e2 = w2_ref.shape[1]

    ynn = ynn_ref[0]                                    # [K, T, E1] bf16
    y0 = y0_ref[0]                                      # [T, E1]    bf16

    # conv1 + BN(eval) are folded into the inputs -> edge projection + ReLU is
    # just a broadcast subtract and a max with 0 (exact algebra).
    h = jnp.maximum(ynn - y0[None], 0.0)                # [K, T, E1] bf16

    # One batched MXU matmul for all K neighbors (RHS staged once, f32 accum),
    # then max over K; conv2's bias is added once after the max (exact).
    hw = jnp.dot(h.reshape(k * tn, e1), w2_ref[...],
                 preferred_element_type=jnp.float32)    # [K*T, E2] f32
    acc = jnp.max(hw.reshape(k, tn, e2), axis=0)        # [T, E2]   f32
    acc = acc + b2_ref[...]

    out = jnp.dot(acc.astype(w3_ref.dtype), w3_ref[...],
                  preferred_element_type=jnp.float32) + b3_ref[...]
    out_ref[0] = out.astype(out_ref.dtype)


def _pick_tile(n, b, max_tile=1024, min_steps=8):
    """Largest power-of-two tile <= max_tile that divides n (fallback: n),
    then shrink while keeping the (B, N/T) grid deep enough for the pipeline
    and v7x's two TensorCores."""
    t = min(n, max_tile)
    while t > 8 and n % t:
        t //= 2
    if n % t:
        t = n                                           # whole axis, one block
    while (b * (n // t) < min_steps and t % 2 == 0
           and (t // 2) % 8 == 0 and n % (t // 2) == 0):
        t //= 2
    return t


def propagate(x_bnc, idx, params, tile_n=None):
    """One GNN Propagate layer (Conv2DBlock + neighbor max + 1x1 Conv1d).

    x_bnc: [B, N, Cin] f32, idx: [B, N, K] -> [B, N, E3] f32.
    """
    w1, s1, t1, w2, b2, w3, b3 = params
    B, N, _ = x_bnc.shape
    k = idx.shape[-1]
    E1, E2, E3 = w1.shape[1], w2.shape[1], w3.shape[1]

    if tile_n is None:
        tile_n = _pick_tile(N, B)
    if N % tile_n:
        raise ValueError(f"tile_n={tile_n} must divide N={N}")

    # --- XLA glue ---------------------------------------------------------
    # Fold BN(eval) into the first 1x1 conv and pre-project once per point
    # BEFORE the gather (a 1x1 conv commutes with the gather): conv1/BN never
    # enter the kernel and their FLOPs are not duplicated K times.
    y = jnp.einsum("bnc,ce->bne", x_bnc, w1 * s1)             # [B, N, E1] f32
    y0c = (y - t1).astype(jnp.bfloat16)                       # centers, shift folded
    idx_t = jnp.swapaxes(idx, 1, 2)                           # [B, K, N]
    y_nn = jax.vmap(lambda yb, ib: yb[ib])(y, idx_t).astype(jnp.bfloat16)  # [B,K,N,E1]

    # bf16 activations/weights halve the dominant HBM stream and use the
    # native bf16 MXU path; accumulation stays f32 inside the kernel.
    w2b = w2.astype(jnp.bfloat16)
    w3b = w3.astype(jnp.bfloat16)

    kern = functools.partial(_propagate_kernel, k=k)
    return pl.pallas_call(
        kern,
        out_shape=jax.ShapeDtypeStruct((B, N, E3), jnp.float32),
        grid=(B, N // tile_n),
        in_specs=[
            pl.BlockSpec((1, k, tile_n, E1), lambda b, t: (b, 0, t, 0)),
            pl.BlockSpec((1, tile_n, E1), lambda b, t: (b, t, 0)),
            pl.BlockSpec((E1, E2), lambda b, t: (0, 0)),
            pl.BlockSpec((1, E2), lambda b, t: (0, 0)),
            pl.BlockSpec((E2, E3), lambda b, t: (0, 0)),
            pl.BlockSpec((1, E3), lambda b, t: (0, 0)),
        ],
        out_specs=pl.BlockSpec((1, tile_n, E3), lambda b, t: (b, t, 0)),
        compiler_params=pltpu.CompilerParams(
            dimension_semantics=("parallel", "parallel"),
            vmem_limit_bytes=32 * 1024 * 1024,
        ),
    )(y_nn, y0c, w2b, b2, w3b, b3)


# ------------------------------ knn (glue) -------------------------------- #
# TODO(synk): top_k has no clean Pallas TPU lowering, so knn stays in plain JAX.
def knn(x_bcn, k):
    xt = jnp.swapaxes(x_bcn, 1, 2)                                # [B, N, C]
    inner = -2.0 * jnp.einsum("bnc,bmc->bnm", xt, xt)
    xx = jnp.sum(x_bcn ** 2, axis=1, keepdims=True)               # [B, 1, N]
    pd = -xx - inner - jnp.swapaxes(xx, 1, 2)                     # [B, N, N]
    return jax.lax.top_k(pd, k)[1]                                # [B, N, K]


# --------------------------- parameter creation ---------------------------- #
def init_propagate(key, cin, emb):
    ks = jax.random.split(key, 7)
    w1 = 0.1 * jax.random.normal(ks[0], (cin, emb), jnp.float32)        # Conv2d (no bias)
    gamma = 1.0 + 0.05 * jax.random.normal(ks[1], (emb,), jnp.float32)  # BN gamma
    beta = 0.05 * jax.random.normal(ks[2], (emb,), jnp.float32)         # BN beta
    # BatchNorm eval mode with fresh running stats (mean=0, var=1, eps=1e-5)
    s1 = (gamma / jnp.sqrt(1.0 + 1e-5)).reshape(1, emb)
    t1 = beta.reshape(1, emb)
    w2 = 0.1 * jax.random.normal(ks[3], (emb, emb), jnp.float32)        # Conv2d (bias)
    b2 = 0.05 * jax.random.normal(ks[4], (emb,), jnp.float32).reshape(1, emb)
    w3 = 0.1 * jax.random.normal(ks[5], (emb, emb), jnp.float32)        # Conv1d (bias)
    b3 = 0.05 * jax.random.normal(ks[6], (emb,), jnp.float32).reshape(1, emb)
    return (w1, s1, t1, w2, b2, w3, b3)


def init_gnn(key, emb_dims=EMB):
    ks = jax.random.split(key, 5)
    chans = [(3, 64), (64, 64), (64, 64), (64, 64), (64, emb_dims)]
    return [init_propagate(k, cin, e) for k, (cin, e) in zip(ks, chans)]


# ------------------------------ GNN forward -------------------------------- #
def gnn_forward(x_bcn, params_list):
    idx = knn(x_bcn, K)                         # [B, N, K]
    x = jnp.swapaxes(x_bcn, 1, 2)               # [B, N, 3]
    for p in params_list:
        x = propagate(x, idx, p)
    return jnp.swapaxes(x, 1, 2)                # [B, EMB, N] (PyTorch layout)


# ----------------------- pure-JAX references (check) ----------------------- #
def propagate_ref_f32(x_bnc, idx, params):
    """Full-f32 PyTorch-equivalent Conv2DBlock + max-over-K + Conv1d."""
    w1, s1, t1, w2, b2, w3, b3 = params
    nn_feat = jax.vmap(lambda xb, ib: xb[ib])(x_bnc, idx)         # [B, N, K, C]
    e = nn_feat - x_bnc[:, :, None, :]
    h = jnp.maximum(jnp.einsum("bnkc,ce->bnke", e, w1) * s1 + t1, 0.0)
    h = jnp.einsum("bnke,ef->bnkf", h, w2) + b2
    h = h.max(axis=2)
    return jnp.einsum("bne,ef->bnf", h, w3) + b3


def propagate_ref_bf16(x_bnc, idx, params):
    """Mirrors the kernel's exact quantization points (bf16 activations and
    weights, f32 accumulation) so kernel mechanics can be checked tightly."""
    w1, s1, t1, w2, b2, w3, b3 = params
    y = jnp.einsum("bnc,ce->bne", x_bnc, w1 * s1)
    y0c = (y - t1).astype(jnp.bfloat16)
    ynn = jax.vmap(lambda yb, ib: yb[ib])(y, idx).astype(jnp.bfloat16)  # [B,N,K,E1]
    h = jnp.maximum(ynn - y0c[:, :, None, :], 0.0)
    hw = jnp.einsum("bnke,ef->bnkf", h, w2.astype(jnp.bfloat16),
                    preferred_element_type=jnp.float32)
    acc = hw.max(axis=2) + b2
    return jnp.einsum("bne,ef->bnf", acc.astype(jnp.bfloat16),
                      w3.astype(jnp.bfloat16),
                      preferred_element_type=jnp.float32) + b3


def gnn_ref(x_bcn, params_list, propagate_fn):
    idx = knn(x_bcn, K)
    x = jnp.swapaxes(x_bcn, 1, 2)
    for p in params_list:
        x = propagate_fn(x, idx, p)
    return jnp.swapaxes(x, 1, 2)


# ---------------------------------- main ----------------------------------- #
if __name__ == "__main__":
    key = jax.random.PRNGKey(0)
    kx, kp = jax.random.split(key)
    B, N = 2, 16
    x = jax.random.normal(kx, (B, 3, N), jnp.float32)   # PyTorch input layout [B, 3, N]
    params = init_gnn(kp, emb_dims=EMB)

    out = jax.block_until_ready(gnn_forward(x, params))
    assert out.shape == (B, EMB, N), out.shape

    # Tight check against a dtype-matched reference (verifies the kernel's
    # tiling / fusion / max-over-K mechanics).
    ref_bf16 = gnn_ref(x, params, propagate_ref_bf16)
    assert jnp.allclose(out, ref_bf16, atol=1e-3, rtol=1e-3), \
        "mismatch vs dtype-matched JAX reference"

    # Semantic check against the full-f32 PyTorch-equivalent pipeline; the
    # tolerance is loosened to cover the deliberate bf16 activation/weight
    # tradeoff (per perf review).
    ref_f32 = gnn_ref(x, params, propagate_ref_f32)
    assert jnp.allclose(out, ref_f32, atol=3e-2, rtol=3e-2), \
        "mismatch vs f32 JAX reference"

    print("KERNEL_OK")
</pallas_src>

<mosaic_0001>
module attributes {stable_mosaic.version = 11 : i64} {
  func.func @_propagate_kernel(%arg0: i32, %arg1: i32, %arg2: memref<1x12x8x64xbf16, #tpu.memory_space<vmem>>, %arg3: memref<1x8x64xbf16, #tpu.memory_space<vmem>>, %arg4: memref<64x64xbf16, #tpu.memory_space<vmem>>, %arg5: memref<1x64xf32, #tpu.memory_space<vmem>>, %arg6: memref<64x64xbf16, #tpu.memory_space<vmem>>, %arg7: memref<1x64xf32, #tpu.memory_space<vmem>>, %arg8: memref<1x8x64xf32, #tpu.memory_space<vmem>>) attributes {dimension_semantics = [#tpu.dimension_semantics<parallel>, #tpu.dimension_semantics<parallel>], iteration_bounds = array<i64: 2, 2>, scalar_prefetch = 0 : i64, scratch_operands = 0 : i64, tpu.core_type = #tpu.core_type<tc>, window_params = [{transform_indices = @transform_0, window_bounds = array<i64: 1, 12, 8, 64>}, {transform_indices = @transform_1, window_bounds = array<i64: 1, 8, 64>}, {pipeline_mode = #tpu.pipeline_mode<synchronous>, transform_indices = @transform_2, window_bounds = array<i64: 64, 64>}, {pipeline_mode = #tpu.pipeline_mode<synchronous>, transform_indices = @transform_3, window_bounds = array<i64: 1, 64>}, {pipeline_mode = #tpu.pipeline_mode<synchronous>, transform_indices = @transform_4, window_bounds = array<i64: 64, 64>}, {pipeline_mode = #tpu.pipeline_mode<synchronous>, transform_indices = @transform_5, window_bounds = array<i64: 1, 64>}, {transform_indices = @transform_6, window_bounds = array<i64: 1, 8, 64>}]} {
    %c0 = arith.constant 0 : index
    %c0_0 = arith.constant 0 : index
    %c0_1 = arith.constant 0 : index
    %c0_2 = arith.constant 0 : index
    %0 = vector.load %arg2[%c0, %c0_0, %c0_1, %c0_2] : memref<1x12x8x64xbf16, #tpu.memory_space<vmem>>, vector<1x12x8x64xbf16>
    %1 = vector.shape_cast %0 : vector<1x12x8x64xbf16> to vector<12x8x64xbf16>
    %c0_3 = arith.constant 0 : index
    %c0_4 = arith.constant 0 : index
    %c0_5 = arith.constant 0 : index
    %2 = vector.load %arg3[%c0_3, %c0_4, %c0_5] : memref<1x8x64xbf16, #tpu.memory_space<vmem>>, vector<1x8x64xbf16>
    %3 = vector.shape_cast %2 : vector<1x8x64xbf16> to vector<8x64xbf16>
    %4 = vector.shape_cast %3 : vector<8x64xbf16> to vector<1x8x64xbf16>
    %5 = vector.broadcast %4 : vector<1x8x64xbf16> to vector<12x8x64xbf16>
    %6 = arith.subf %1, %5 : vector<12x8x64xbf16>
    %cst = arith.constant 0.000000e+00 : bf16
    %7 = vector.broadcast %cst : bf16 to vector<12x8x64xbf16>
    %8 = arith.maximumf %6, %7 : vector<12x8x64xbf16>
    %9 = vector.shape_cast %8 : vector<12x8x64xbf16> to vector<96x64xbf16>
    %c0_6 = arith.constant 0 : index
    %c0_7 = arith.constant 0 : index
    %10 = vector.load %arg4[%c0_6, %c0_7] : memref<64x64xbf16, #tpu.memory_space<vmem>>, vector<64x64xbf16>
    %cst_8 = arith.constant dense<0.000000e+00> : vector<96x64xf32>
    %11 = tpu.matmul %9, %10, %cst_8 {dimension_numbers = #tpu.dot_dimension_numbers<[1], [0], [0], [1], [0, 0, 1, 1], [], []>} : vector<96x64xbf16>, vector<64x64xbf16>, vector<96x64xf32> -> vector<96x64xf32>
    %12 = vector.shape_cast %11 : vector<96x64xf32> to vector<12x8x64xf32>
    %cst_9 = arith.constant dense<0xFF800000> : vector<8x64xf32>
    %13 = vector.multi_reduction <maximumf>, %12, %cst_9 [0] : vector<12x8x64xf32> to vector<8x64xf32>
    %c0_10 = arith.constant 0 : index
    %c0_11 = arith.constant 0 : index
    %14 = vector.load %arg5[%c0_10, %c0_11] : memref<1x64xf32, #tpu.memory_space<vmem>>, vector<1x64xf32>
    %15 = vector.broadcast %14 : vector<1x64xf32> to vector<8x64xf32>
    %16 = arith.addf %13, %15 : vector<8x64xf32>
    %17 = arith.truncf %16 : vector<8x64xf32> to vector<8x64xbf16>
    %c0_12 = arith.constant 0 : index
    %c0_13 = arith.constant 0 : index
    %18 = vector.load %arg6[%c0_12, %c0_13] : memref<64x64xbf16, #tpu.memory_space<vmem>>, vector<64x64xbf16>
    %cst_14 = arith.constant dense<0.000000e+00> : vector<8x64xf32>
    %19 = tpu.matmul %17, %18, %cst_14 {dimension_numbers = #tpu.dot_dimension_numbers<[1], [0], [0], [1], [0, 0, 1, 1], [], []>} : vector<8x64xbf16>, vector<64x64xbf16>, vector<8x64xf32> -> vector<8x64xf32>
    %c0_15 = arith.constant 0 : index
    %c0_16 = arith.constant 0 : index
    %20 = vector.load %arg7[%c0_15, %c0_16] : memref<1x64xf32, #tpu.memory_space<vmem>>, vector<1x64xf32>
    %21 = vector.broadcast %20 : vector<1x64xf32> to vector<8x64xf32>
    %22 = arith.addf %19, %21 : vector<8x64xf32>
    %c0_17 = arith.constant 0 : index
    %c0_18 = arith.constant 0 : index
    %c0_19 = arith.constant 0 : index
    %23 = vector.load %arg8[%c0_17, %c0_18, %c0_19] : memref<1x8x64xf32, #tpu.memory_space<vmem>>, vector<1x8x64xf32>
    %24 = vector.shape_cast %23 : vector<1x8x64xf32> to vector<8x64xf32>
    %25 = vector.shape_cast %22 : vector<8x64xf32> to vector<1x8x64xf32>
    tpu.vector_store %arg8[%c0_17, %c0_18, %c0_19], %25 {strides = array<i32>} : memref<1x8x64xf32, #tpu.memory_space<vmem>>, vector<1x8x64xf32>,
    return
  }
  func.func @transform_0(%arg0: i32, %arg1: i32) -> (i32, i32, i32, i32) {
    %c0_i32 = arith.constant 0 : i32
    %c0_i32_0 = arith.constant 0 : i32
    %c0_i32_1 = arith.constant 0 : i32
    return %arg0, %c0_i32, %arg1, %c0_i32_0 : i32, i32, i32, i32
  }
  func.func @transform_1(%arg0: i32, %arg1: i32) -> (i32, i32, i32) {
    %c0_i32 = arith.constant 0 : i32
    %c0_i32_0 = arith.constant 0 : i32
    return %arg0, %arg1, %c0_i32 : i32, i32, i32
  }
  func.func @transform_2(%arg0: i32, %arg1: i32) -> (i32, i32) {
    %c0_i32 = arith.constant 0 : i32
    %c0_i32_0 = arith.constant 0 : i32
    %c0_i32_1 = arith.constant 0 : i32
    return %c0_i32, %c0_i32_0 : i32, i32
  }
  func.func @transform_3(%arg0: i32, %arg1: i32) -> (i32, i32) {
    %c0_i32 = arith.constant 0 : i32
    %c0_i32_0 = arith.constant 0 : i32
    %c0_i32_1 = arith.constant 0 : i32
    return %c0_i32, %c0_i32_0 : i32, i32
  }
  func.func @transform_4(%arg0: i32, %arg1: i32) -> (i32, i32) {
    %c0_i32 = arith.constant 0 : i32
    %c0_i32_0 = arith.constant 0 : i32
    %c0_i32_1 = arith.constant 0 : i32
    return %c0_i32, %c0_i32_0 : i32, i32
  }
  func.func @transform_5(%arg0: i32, %arg1: i32) -> (i32, i32) {
    %c0_i32 = arith.constant 0 : i32
    %c0_i32_0 = arith.constant 0 : i32
    %c0_i32_1 = arith.constant 0 : i32
    return %c0_i32, %c0_i32_0 : i32, i32
  }
  func.func @transform_6(%arg0: i32, %arg1: i32) -> (i32, i32, i32) {
    %c0_i32 = arith.constant 0 : i32
    %c0_i32_0 = arith.constant 0 : i32
    return %arg0, %arg1, %c0_i32 : i32, i32, i32
  }
}

</mosaic_0001>

<llo_original>
// kernel: tpu_custom_call.1
$region0: #{tpu_custom_call.1}
  #allocation0 [shape = 'u32[]', space=smem, size = 0x4, offset = 0x4, fixed_abs, tag = 'smem constant byte address 0x4 - core index']
  #allocation1 [shape = 'u32[144,128]{1,0:T(1,128)}', space=vmem, size = 0x12000, scoped, tag = 'internal scratch']
  %s0 = inlined_call_operand.hbm [shape: bf16[2,12,16,64], index: 0, kind: input, shape index: {}]
  %s1 = inlined_call_operand.hbm [shape: bf16[2,16,64], index: 1, kind: input, shape index: {}]
  %s2 = inlined_call_operand.hbm [shape: bf16[64,64], index: 2, kind: input, shape index: {}]
  %s3 = inlined_call_operand.vmem [shape: f32[1,64], index: 3, kind: input, shape index: {}]
  %s4 = inlined_call_operand.hbm [shape: bf16[64,64], index: 4, kind: input, shape index: {}]
  %s5 = inlined_call_operand.vmem [shape: f32[1,64], index: 5, kind: input, shape index: {}]
  %s6 = inlined_call_operand.hbm [shape: f32[2,16,64], index: 6, kind: output, shape index: {}]
  %s7 = sld [smem:[#allocation0]]
  $region73: #{tpu_custom_call.1} parent=0
    _
  %s9 = ssub.s32 1, %s7
  %s10 = scalar_select 0, %s9, %s7
  $region1: #{tpu_custom_call.1} parent=0
    #allocation2 [shape = 'u8[49152]{0}', space=vmem, size = 0xc000, scoped, tag = 'input window, operand 0']
    #allocation3 [shape = 's32[2]{0}', space=sflag, size = 0x8, scoped, tag = 'scoped memory for tpu_custom_call.1']
    #allocation4 [shape = 's32[2]{0}', space=sflag, size = 0x8, scoped, tag = 'scoped memory for tpu_custom_call.1']
    #allocation5 [shape = 'u8[4096]{0}', space=vmem, size = 0x1000, scoped, tag = 'input window, operand 1']
    #allocation6 [shape = 's32[2]{0}', space=sflag, size = 0x8, scoped, tag = 'scoped memory for tpu_custom_call.1']
    #allocation7 [shape = 'u8[16384]{0}', space=vmem, size = 0x4000, scoped, tag = 'input window, operand 2, single buffered']
    #allocation8 [shape = 'u8[16384]{0}', space=vmem, size = 0x4000, scoped, tag = 'input window, operand 4, single buffered']
    #allocation9 [shape = 's32[1]{0}', space=sflag, size = 0x4, scoped, tag = 'scoped memory for tpu_custom_call.1']
    #allocation10 [shape = 'u8[8192]{0}', space=vmem, size = 0x2000, scoped, tag = 'output window, operand 0']
    %11 = vsyncpa [#allocation3], 0
    %s12 = scalar_lea.sflag [#allocation3], 1
    %13 = vsyncpa %s12, 0
    %14 = vsyncpa [#allocation6], 0
    %s15 = scalar_lea.sflag [#allocation6], 1
    %16 = vsyncpa %s15, 0
    %17 = vsyncpa [#allocation9], 0
    %18 = vsyncpa [#allocation4], 0
    %s19 = scalar_lea.sflag [#allocation4], 1
    %20 = vsyncpa %s19, 0
    loop: start=0, step=1, limit=6
    $region2: #{tpu_custom_call.1} parent=1 // loop_pre_header
      _
    $region3: #{tpu_custom_call.1} parent=1 // loop_header
      %s22 = sphi 0, %s26
      %p23 = scmp.ge.s32.totalorder %s22, 6
      %s29 = sphi 0, %s41
      %s30 = sphi 0, %s37
      %s31 = sphi 0, %s29
      %s32 = sphi 0, %s30
      %s33 = sphi 0, %s31
      %s34 = sphi 0, %s32
      %s46 = sphi 0, %s48
      %s49 = sphi 0, %s46
      %s50 = sphi 0, %s49
      %s66 = sphi 0, %s50
      %s74 = sphi 0, %s76
      %s77 = sphi 0, %s74
      %s78 = sphi 0, %s77
      %s94 = sphi 0, %s78
      %s98 = sphi 0, %s98
      %s100 = sphi 0, %s98
      %s101 = sphi 0, %s100
      %s115 = sphi 0, %s101
      %s119 = sphi 0, %s119
      %s121 = sphi 0, %s119
      %s122 = sphi 0, %s121
      %s136 = sphi 0, %s122
      %s140 = sphi 0, %s140
      %s142 = sphi 0, %s140
      %s143 = sphi 0, %s142
      %s157 = sphi 0, %s143
      %s161 = sphi 0, %s161
      %s163 = sphi 0, %s161
      %s164 = sphi 0, %s163
      %s178 = sphi 0, %s164
      %s186 = sphi 0, %s188
      %s189 = sphi 0, %s186
      %s190 = sphi 0, %s189
      %s206 = sphi 0, %s190
    $region4: #{tpu_custom_call.1} parent=1 // loop_header_branch
      %25 = sbr.rel (%p23) target = $region8
    $region5: #{tpu_custom_call.1} parent=1 // loop_body
      %s27 = ssub.s32 %s22, 1
      %s28 = ssub.s32 %s22, 2
      %s35 = sadd.s32 1, %s30
      %p36 = scmp.ge.s32.totalorder %s35, 2
      %s37 = scalar_select %p36, 0, %s35
      %s38 = sadd.s32 1, %s29
      %s39 = scalar_select %p36, %s38, %s29
      %p40 = scmp.ge.s32.totalorder %s39, 2
      %s41 = scalar_select %p40, 0, %s39
      %s42 = ssub.s32 %s29, %s41
      %s43 = ssub.s32 %s30, %s37
      %s44 = sor.u32 %s42, %s43
      %p45 = scmp.eq.s32.totalorder %s44, 0
      %s47 = sadd.s32 %s46, 1
      %s48 = scalar_select %p45, %s46, %s47
      %p51 = pneg %p45
      %p52 = scmp.eq.s32.totalorder %s22, 3
      %p53 = por %p51, %p52
      %p54 = scmp.ne.s32.totalorder %s46, %s49
      %p55 = scmp.eq.s32.totalorder %s22, 0
      %p56 = por %p54, %p55
      %p57 = scmp.ne.s32.totalorder %s46, %s49
      %p58 = scmp.eq.s32.totalorder %s27, 3
      %p59 = por %p57, %p58
      %p60 = scmp.ne.s32.totalorder %s49, %s50
      %p61 = scmp.eq.s32.totalorder %s27, 0
      %p62 = por %p60, %p61
      %p63 = scmp.ne.s32.totalorder %s49, %s50
      %p64 = scmp.eq.s32.totalorder %s28, 3
      %p65 = por %p63, %p64
      %p67 = scmp.ne.s32.totalorder %s50, %s66
      %p68 = scmp.eq.s32.totalorder %s28, 0
      %p69 = por %p67, %p68
      %s70 = ssub.s32 %s29, %s41
      %s71 = ssub.s32 %s30, %s37
      %s72 = sor.u32 %s70, %s71
      %p73 = scmp.eq.s32.totalorder %s72, 0
      %s75 = sadd.s32 %s74, 1
      %s76 = scalar_select %p73, %s74, %s75
      %p79 = pneg %p73
      %p80 = scmp.eq.s32.totalorder %s22, 3
      %p81 = por %p79, %p80
      %p82 = scmp.ne.s32.totalorder %s74, %s77
      %p83 = scmp.eq.s32.totalorder %s22, 0
      %p84 = por %p82, %p83
      %p85 = scmp.ne.s32.totalorder %s74, %s77
      %p86 = scmp.eq.s32.totalorder %s27, 3
      %p87 = por %p85, %p86
      %p88 = scmp.ne.s32.totalorder %s77, %s78
      %p89 = scmp.eq.s32.totalorder %s27, 0
      %p90 = por %p88, %p89
      %p91 = scmp.ne.s32.totalorder %s77, %s78
      %p92 = scmp.eq.s32.totalorder %s28, 3
      %p93 = por %p91, %p92
      %p95 = scmp.ne.s32.totalorder %s78, %s94
      %p96 = scmp.eq.s32.totalorder %s28, 0
      %p97 = por %p95, %p96
      %s99 = sadd.s32 %s98, 1
      %p102 = scmp.eq.s32.totalorder %s22, 3
      %p103 = scmp.ne.s32.totalorder %s98, %s100
      %p104 = scmp.eq.s32.totalorder %s22, 0
      %p105 = por %p103, %p104
      %p106 = scmp.ne.s32.totalorder %s98, %s100
      %p107 = scmp.eq.s32.totalorder %s27, 3
      %p108 = por %p106, %p107
      %p109 = scmp.ne.s32.totalorder %s100, %s101
      %p110 = scmp.eq.s32.totalorder %s27, 0
      %p111 = por %p109, %p110
      %p112 = scmp.ne.s32.totalorder %s100, %s101
      %p113 = scmp.eq.s32.totalorder %s28, 3
      %p114 = por %p112, %p113
      %p116 = scmp.ne.s32.totalorder %s101, %s115
      %p117 = scmp.eq.s32.totalorder %s28, 0
      %p118 = por %p116, %p117
      %s120 = sadd.s32 %s119, 1
      %p123 = scmp.eq.s32.totalorder %s22, 3
      %p124 = scmp.ne.s32.totalorder %s119, %s121
      %p125 = scmp.eq.s32.totalorder %s22, 0
      %p126 = por %p124, %p125
      %p127 = scmp.ne.s32.totalorder %s119, %s121
      %p128 = scmp.eq.s32.totalorder %s27, 3
      %p129 = por %p127, %p128
      %p130 = scmp.ne.s32.totalorder %s121, %s122
      %p131 = scmp.eq.s32.totalorder %s27, 0
      %p132 = por %p130, %p131
      %p133 = scmp.ne.s32.totalorder %s121, %s122
      %p134 = scmp.eq.s32.totalorder %s28, 3
      %p135 = por %p133, %p134
      %p137 = scmp.ne.s32.totalorder %s122, %s136
      %p138 = scmp.eq.s32.totalorder %s28, 0
      %p139 = por %p137, %p138
      %s141 = sadd.s32 %s140, 1
      %p144 = scmp.eq.s32.totalorder %s22, 3
      %p145 = scmp.ne.s32.totalorder %s140, %s142
      %p146 = scmp.eq.s32.totalorder %s22, 0
      %p147 = por %p145, %p146
      %p148 = scmp.ne.s32.totalorder %s140, %s142
      %p149 = scmp.eq.s32.totalorder %s27, 3
      %p150 = por %p148, %p149
      %p151 = scmp.ne.s32.totalorder %s142, %s143
      %p152 = scmp.eq.s32.totalorder %s27, 0
      %p153 = por %p151, %p152
      %p154 = scmp.ne.s32.totalorder %s142, %s143
      %p155 = scmp.eq.s32.totalorder %s28, 3
      %p156 = por %p154, %p155
      %p158 = scmp.ne.s32.totalorder %s143, %s157
      %p159 = scmp.eq.s32.totalorder %s28, 0
      %p160 = por %p158, %p159
      %s162 = sadd.s32 %s161, 1
      %p165 = scmp.eq.s32.totalorder %s22, 3
      %p166 = scmp.ne.s32.totalorder %s161, %s163
      %p167 = scmp.eq.s32.totalorder %s22, 0
      %p168 = por %p166, %p167
      %p169 = scmp.ne.s32.totalorder %s161, %s163
      %p170 = scmp.eq.s32.totalorder %s27, 3
      %p171 = por %p169, %p170
      %p172 = scmp.ne.s32.totalorder %s163, %s164
      %p173 = scmp.eq.s32.totalorder %s27, 0
      %p174 = por %p172, %p173
      %p175 = scmp.ne.s32.totalorder %s163, %s164
      %p176 = scmp.eq.s32.totalorder %s28, 3
      %p177 = por %p175, %p176
      %p179 = scmp.ne.s32.totalorder %s164, %s178
      %p180 = scmp.eq.s32.totalorder %s28, 0
      %p181 = por %p179, %p180
      %s182 = ssub.s32 %s29, %s41
      %s183 = ssub.s32 %s30, %s37
      %s184 = sor.u32 %s182, %s183
      %p185 = scmp.eq.s32.totalorder %s184, 0
      %s187 = sadd.s32 %s186, 1
      %s188 = scalar_select %p185, %s186, %s187
      %p191 = pneg %p185
      %p192 = scmp.eq.s32.totalorder %s22, 3
      %p193 = por %p191, %p192
      %p194 = scmp.ne.s32.totalorder %s186, %s189
      %p195 = scmp.eq.s32.totalorder %s22, 0
      %p196 = por %p194, %p195
      %p197 = scmp.ne.s32.totalorder %s186, %s189
      %p198 = scmp.eq.s32.totalorder %s27, 3
      %p199 = por %p197, %p198
      %p200 = scmp.ne.s32.totalorder %s189, %s190
      %p201 = scmp.eq.s32.totalorder %s27, 0
      %p202 = por %p200, %p201
      %p203 = scmp.ne.s32.totalorder %s189, %s190
      %p204 = scmp.eq.s32.totalorder %s28, 3
      %p205 = por %p203, %p204
      %p207 = scmp.ne.s32.totalorder %s190, %s206
      %p208 = scmp.eq.s32.totalorder %s28, 0
      %p209 = por %p207, %p208
      %p210 = scmp.le.s32.totalorder 1, %s22
      %p211 = scmp.lt.s32.totalorder %s22, 5
      %p212 = pnand %p210, %p211
      %p213 = pneg %p212
      // Predicated region
      $region9: #{tpu_custom_call.1} parent=5 // pred_check
        _
      $region10: #{tpu_custom_call.1} parent=5 // pred_check_branch
        %215 = sbr.rel (%p212) target = $region12
      $region11: #{tpu_custom_call.1} parent=5 // pred_region
        %s216 = ssub.s32 %s22, 1
        // Predicated region
        $region13: #{tpu_custom_call.1} parent=11 // pred_check
          %p217 = pneg %p111
        $region14: #{tpu_custom_call.1} parent=11 // pred_check_branch
          %219 = sbr.rel (%p217) target = $region16
        $region15: #{tpu_custom_call.1} parent=11 // pred_region
          %s221 = ssub.s32 512, 512
          %222 = vsyncadd [#allocation6], %s221
          %s223 = sshll.u32 [#allocation7], 4
          %s224 = int_to_ptr.vmem [resolvable:$true] %s223
          %229 = dma.hbm_to_vmem [thread:$0]  %s2, 512, %s224, [#allocation6], 64, 64, 4
        $region16: #{tpu_custom_call.1} parent=11 // pred_fallthru
          _
        // Predicated region
        $region17: #{tpu_custom_call.1} parent=11 // pred_check
          %p230 = pneg %p132
        $region18: #{tpu_custom_call.1} parent=11 // pred_check_branch
          %232 = sbr.rel (%p230) target = $region20
        $region19: #{tpu_custom_call.1} parent=11 // pred_region
          _
        $region20: #{tpu_custom_call.1} parent=11 // pred_fallthru
          _
        // Predicated region
        $region21: #{tpu_custom_call.1} parent=11 // pred_check
          %p233 = pneg %p153
        $region22: #{tpu_custom_call.1} parent=11 // pred_check_branch
          %235 = sbr.rel (%p233) target = $region24
        $region23: #{tpu_custom_call.1} parent=11 // pred_region
          %s237 = ssub.s32 512, 512
          %238 = vsyncadd [#allocation9], %s237
          %s239 = sshll.u32 [#allocation8], 4
          %s240 = int_to_ptr.vmem [resolvable:$true] %s239
          %245 = dma.hbm_to_vmem [thread:$0]  %s4, 512, %s240, [#allocation9], 64, 64, 4
        $region24: #{tpu_custom_call.1} parent=11 // pred_fallthru
          _
        // Predicated region
        $region25: #{tpu_custom_call.1} parent=11 // pred_check
          %p246 = pneg %p174
        $region26: #{tpu_custom_call.1} parent=11 // pred_check_branch
          %248 = sbr.rel (%p246) target = $region28
        $region27: #{tpu_custom_call.1} parent=11 // pred_region
          _
        $region28: #{tpu_custom_call.1} parent=11 // pred_fallthru
          _
      $region12: #{tpu_custom_call.1} parent=5 // pred_fallthru
        _
      %p249 = scmp.lt.s32.totalorder %s22, 4
      // Predicated region
      $region29: #{tpu_custom_call.1} parent=5 // pred_check
        %p250 = pneg %p249
      $region30: #{tpu_custom_call.1} parent=5 // pred_check_branch
        %252 = sbr.rel (%p250) target = $region32
      $region31: #{tpu_custom_call.1} parent=5 // pred_region
        // Predicated region
        $region33: #{tpu_custom_call.1} parent=31 // pred_check
          %p253 = pneg %p56
        $region34: #{tpu_custom_call.1} parent=31 // pred_check_branch
          %255 = sbr.rel (%p253) target = $region36
        $region35: #{tpu_custom_call.1} parent=31 // pred_region
          %s256 = sand.u32 %s46, 1
          %s257 = scalar_lea.sflag [#allocation3], %s256
          %s258 = sand.u32 %s46, 1
          %s259 = smul.addr %s258, 48
          %s260 = scalar_lea.vmem [#allocation2], %s259
          %s262 = ssub.s32 768, 768
          %263 = vsyncadd %s257, %s262
          %s264 = smul.addr %s29, 24
          %s265 = sadd.s32 %s30, %s264
          %s266 = smul.addr %s265, 64
          %s267 = scalar_lea.hbm %s0, %s266
          %s268 = sshll.u32 %s260, 4
          %s269 = int_to_ptr.vmem [resolvable:$true] %s268
          %274 = dma.hbm_to_vmem [thread:$0]  %s267, 768, %s269, %s257, 128, 64, 4
        $region36: #{tpu_custom_call.1} parent=31 // pred_fallthru
          _
        // Predicated region
        $region37: #{tpu_custom_call.1} parent=31 // pred_check
          %p275 = pneg %p84
        $region38: #{tpu_custom_call.1} parent=31 // pred_check_branch
          %277 = sbr.rel (%p275) target = $region40
        $region39: #{tpu_custom_call.1} parent=31 // pred_region
          %s278 = sand.u32 %s22, 1
          %s279 = scalar_lea.sflag [#allocation6], %s278
          %s280 = sand.u32 %s74, 1
          %s281 = smul.addr %s280, 4
          %s282 = scalar_lea.vmem [#allocation5], %s281
          %s284 = ssub.s32 64, 64
          %285 = vsyncadd %s279, %s284
          %s286 = smul.addr %s29, 2
          %s287 = sadd.s32 %s30, %s286
          %s288 = smul.addr %s287, 64
          %s289 = scalar_lea.hbm %s1, %s288
          %s291 = sshll.u32 %s282, 4
          %s292 = int_to_ptr.vmem [resolvable:$true] %s291
          %294 = dma.hbm_to_vmem [thread:$0]  %s289, 64, %s292, %s279
        $region40: #{tpu_custom_call.1} parent=31 // pred_fallthru
          _
      $region32: #{tpu_custom_call.1} parent=5 // pred_fallthru
        _
      %p295 = scmp.le.s32.totalorder 1, %s22
      %p296 = scmp.lt.s32.totalorder %s22, 5
      %p297 = pnand %p295, %p296
      %p298 = pneg %p297
      // Predicated region
      $region41: #{tpu_custom_call.1} parent=5 // pred_check
        _
      $region42: #{tpu_custom_call.1} parent=5 // pred_check_branch
        %300 = sbr.rel (%p297) target = $region44
      $region43: #{tpu_custom_call.1} parent=5 // pred_region
        %s301 = ssub.s32 %s22, 1
        %s302 = sand.u32 %s49, 1
        %s303 = scalar_lea.sflag [#allocation3], %s302
        %s304 = sand.u32 %s49, 1
        %s305 = smul.addr %s304, 48
        %s306 = scalar_lea.vmem [#allocation2], %s305
        // Predicated region
        $region45: #{tpu_custom_call.1} parent=43 // pred_check
          %p307 = pneg %p62
        $region46: #{tpu_custom_call.1} parent=43 // pred_check_branch
          %309 = sbr.rel (%p307) target = $region48
        $region47: #{tpu_custom_call.1} parent=43 // pred_region
          %310 = dma.done %s303, 768
        $region48: #{tpu_custom_call.1} parent=43 // pred_fallthru
          _
        %s311 = sand.u32 %s27, 1
        %s312 = scalar_lea.sflag [#allocation6], %s311
        %s313 = sand.u32 %s77, 1
        %s314 = smul.addr %s313, 4
        %s315 = scalar_lea.vmem [#allocation5], %s314
        // Predicated region
        $region49: #{tpu_custom_call.1} parent=43 // pred_check
          %p316 = pneg %p90
        $region50: #{tpu_custom_call.1} parent=43 // pred_check_branch
          %318 = sbr.rel (%p316) target = $region52
        $region51: #{tpu_custom_call.1} parent=43 // pred_region
          %319 = dma.done %s312, 64
        $region52: #{tpu_custom_call.1} parent=43 // pred_fallthru
          _
        // Predicated region
        $region53: #{tpu_custom_call.1} parent=43 // pred_check
          %p320 = pneg %p111
        $region54: #{tpu_custom_call.1} parent=43 // pred_check_branch
          %322 = sbr.rel (%p320) target = $region56
        $region55: #{tpu_custom_call.1} parent=43 // pred_region
          %323 = dma.done [#allocation6], 512
        $region56: #{tpu_custom_call.1} parent=43 // pred_fallthru
          _
        // Predicated region
        $region57: #{tpu_custom_call.1} parent=43 // pred_check
          %p324 = pneg %p153
        $region58: #{tpu_custom_call.1} parent=43 // pred_check_branch
          %326 = sbr.rel (%p324) target = $region60
        $region59: #{tpu_custom_call.1} parent=43 // pred_region
          %327 = dma.done [#allocation9], 512
        $region60: #{tpu_custom_call.1} parent=43 // pred_fallthru
          _
        %s328 = sand.u32 %s49, 1
        %s329 = scalar_lea.sflag [#allocation3], %s328
        %s330 = sand.u32 %s49, 1
        %s331 = smul.addr %s330, 48
        %s332 = scalar_lea.vmem [#allocation2], %s331
        %p333 = pneg %p62
        %p334 = pneg %p59
        %s335 = sand.u32 %s27, 1
        %s336 = scalar_lea.sflag [#allocation6], %s335
        %s337 = sand.u32 %s77, 1
        %s338 = smul.addr %s337, 4
        %s339 = scalar_lea.vmem [#allocation5], %s338
        %p340 = pneg %p90
        %p341 = pneg %p87
        %p342 = pneg %p111
        %p343 = pneg %p108
        %p344 = pneg %p132
        %p345 = pneg %p129
        %p346 = pneg %p153
        %p347 = pneg %p150
        %p348 = pneg %p174
        %p349 = pneg %p171
        %p350 = pneg %p202
        %p351 = pneg %p199
        %s352 = sand.u32 %s189, 1
        %s353 = scalar_lea.sflag [#allocation4], %s352
        %s354 = sand.u32 %s189, 1
        %s355 = smul.addr %s354, 8
        %s356 = scalar_lea.vmem [#allocation10], %s355
        %v358 = vld [vmem:[%s306] sm:$0xf]
        %v359 = vld [vmem:[%s306 + $0x4] sm:$0xf]
        %v360 = vld [vmem:[%s306 + $0x8] sm:$0xf]
        %v361 = vld [vmem:[%s306 + $0xc] sm:$0xf]
        %v362 = vld [vmem:[%s306 + $0x10] sm:$0xf]
        %v363 = vld [vmem:[%s306 + $0x14] sm:$0xf]
        %v364 = vld [vmem:[%s306 + $0x18] sm:$0xf]
        %v365 = vld [vmem:[%s306 + $0x1c] sm:$0xf]
        %v366 = vld [vmem:[%s306 + $0x20] sm:$0xf]
        %v367 = vld [vmem:[%s306 + $0x24] sm:$0xf]
        %v368 = vld [vmem:[%s306 + $0x28] sm:$0xf]
        %v369 = vld [vmem:[%s306 + $0x2c] sm:$0xf]
        %v370 = vld [vmem:[%s315] sm:$0xf]
        %v371 = vsub.bf16 %v358, %v370
        %v372 = vsub.bf16 %v359, %v370
        %v373 = vsub.bf16 %v360, %v370
        %v374 = vsub.bf16 %v361, %v370
        %v375 = vsub.bf16 %v362, %v370
        %v376 = vsub.bf16 %v363, %v370
        %v377 = vsub.bf16 %v364, %v370
        %v378 = vsub.bf16 %v365, %v370
        %v379 = vsub.bf16 %v366, %v370
        %v380 = vsub.bf16 %v367, %v370
        %v381 = vsub.bf16 %v368, %v370
        %v382 = vsub.bf16 %v369, %v370
        %v383 = vmax.bf16 %v371, 0
        %v384 = vmax.bf16 %v372, 0
        %v385 = vmax.bf16 %v373, 0
        %v386 = vmax.bf16 %v374, 0
        %v387 = vmax.bf16 %v375, 0
        %v388 = vmax.bf16 %v376, 0
        %v389 = vmax.bf16 %v377, 0
        %v390 = vmax.bf16 %v378, 0
        %v391 = vmax.bf16 %v379, 0
        %v392 = vmax.bf16 %v380, 0
        %v393 = vmax.bf16 %v381, 0
        %v394 = vmax.bf16 %v382, 0
        %v395 = vld [vmem:[#allocation7] sm:$0xf]
        %v396 = vld [vmem:[#allocation7 + $0x4] sm:$0xf]
        %v397 = vld [vmem:[#allocation7 + $0x8] sm:$0xf]
        %v398 = vld [vmem:[#allocation7 + $0xc] sm:$0xf]
        %v399 = vld [vmem:[#allocation7 + $0x10] sm:$0xf]
        %v400 = vld [vmem:[#allocation7 + $0x14] sm:$0xf]
        %v401 = vld [vmem:[#allocation7 + $0x18] sm:$0xf]
        %v402 = vld [vmem:[#allocation7 + $0x1c] sm:$0xf]
        %v415 = vunpack.c.l.b16 %v383
        %v416 = vunpack.c.l.b16 %v384
        %v417 = vunpack.c.l.b16 %v385
        %v418 = vunpack.c.l.b16 %v386
        %v419 = vunpack.c.l.b16 %v387
        %v420 = vunpack.c.l.b16 %v388
        %v421 = vunpack.c.l.b16 %v389
        %v422 = vunpack.c.l.b16 %v390
        %v423 = vunpack.c.l.b16 %v391
        %v424 = vunpack.c.l.b16 %v392
        %v425 = vunpack.c.l.b16 %v393
        %v426 = vunpack.c.l.b16 %v394
        %v427 = vpack.c.b16 %v416, %v415
        %v428 = vpack.c.b16 %v418, %v417
        %v429 = vpack.c.b16 %v420, %v419
        %v430 = vpack.c.b16 %v422, %v421
        %v431 = vpack.c.b16 %v424, %v423
        %v432 = vpack.c.b16 %v426, %v425
        %v441 = vunpack.c.l.b16 %v395
        %v442 = vunpack.c.l.b16 %v396
        %v443 = vunpack.c.l.b16 %v397
        %v444 = vunpack.c.l.b16 %v398
        %v445 = vunpack.c.l.b16 %v399
        %v446 = vunpack.c.l.b16 %v400
        %v447 = vunpack.c.l.b16 %v401
        %v448 = vunpack.c.l.b16 %v402
        %v449 = vpack.c.b16 %v442, %v441
        %v450 = vpack.c.b16 %v444, %v443
        %v451 = vpack.c.b16 %v446, %v445
        %v452 = vpack.c.b16 %v448, %v447
        %vm457 = vcmask 523264
        %v459 = vsel %vm457, %v427, 0
        %v462 = vsel %vm457, %v428, 0
        %v465 = vsel %vm457, %v429, 0
        %v468 = vsel %vm457, %v430, 0
        %v471 = vsel %vm457, %v431, 0
        %v474 = vsel %vm457, %v432, 0
        %476 = vmatprep.subr.bf16.mxu0 0
        %477 = vmatpush1.bf16.msra.mxu0 %v449
        %478 = vmatprep.subr.bf16.mxu0 0
        %479 = vmatpush1.bf16.msra.mxu0 %v450
        %480 = vmatprep.subr.bf16.mxu0 0
        %481 = vmatpush1.bf16.msra.mxu0 %v451
        %482 = vmatprep.subr.bf16.mxu0 0
        %483 = vmatpush1.bf16.msra.mxu0 %v452
        %484 = vmatprep.subr.bf16.mxu0 0
        %485 = vmatpush1.bf16.msra.mxu0 0
        %486 = vmatprep.subr.bf16.mxu0 0
        %487 = vmatpush1.bf16.msra.mxu0 0
        %488 = vmatprep.subr.bf16.mxu0 0
        %489 = vmatpush1.bf16.msra.mxu0 0
        %490 = vmatprep.subr.bf16.mxu0 0
        %491 = vmatpush1.bf16.msra.mxu0 0
        %492 = vmatprep.subr.bf16.mxu0 0
        %493 = vmatpush1.bf16.msra.mxu0 0
        %494 = vmatprep.subr.bf16.mxu0 0
        %495 = vmatpush1.bf16.msra.mxu0 0
        %496 = vmatprep.subr.bf16.mxu0 0
        %497 = vmatpush1.bf16.msra.mxu0 0
        %498 = vmatprep.subr.bf16.mxu0 0
        %499 = vmatpush1.bf16.msra.mxu0 0
        %500 = vmatprep.subr.bf16.mxu0 0
        %501 = vmatpush1.bf16.msra.mxu0 0
        %502 = vmatprep.subr.bf16.mxu0 0
        %503 = vmatpush1.bf16.msra.mxu0 0
        %504 = vmatprep.subr.bf16.mxu0 0
        %505 = vmatpush1.bf16.msra.mxu0 0
        %506 = vmatprep.subr.bf16.mxu0 0
        %507 = vmatpush1.bf16.msra.mxu0 0
        %508 = vmatprep.mubr.bf16.mxu0 0
        %509 = vmatmul.mubr.bf16.gmra.mrb[0].mxu0 %v459
        %v510 = vpop.f32.mrb[0].mxu0
        %v511 = vadd.f32 0.0, %v510
        %v512 = vpop.f32.mrb[0].mxu0
        %v513 = vpop.f32.mrb[0].mxu0
        %v514 = vadd.f32 0.0, %v513
        %v515 = vpop.f32.mrb[0].mxu0
        %516 = vmatprep.mubr.bf16.mxu0 0
        %517 = vmatmul.mubr.bf16.gmra.mrb[0].mxu0 %v462
        %v518 = vpop.f32.mrb[0].mxu0
        %v519 = vadd.f32 0.0, %v518
        %v520 = vpop.f32.mrb[0].mxu0
        %v521 = vpop.f32.mrb[0].mxu0
        %v522 = vadd.f32 0.0, %v521
        %v523 = vpop.f32.mrb[0].mxu0
        %524 = vmatprep.mubr.bf16.mxu0 0
        %525 = vmatmul.mubr.bf16.gmra.mrb[0].mxu0 %v465
        %v526 = vpop.f32.mrb[0].mxu0
        %v527 = vadd.f32 0.0, %v526
        %v528 = vpop.f32.mrb[0].mxu0
        %v529 = vpop.f32.mrb[0].mxu0
        %v530 = vadd.f32 0.0, %v529
        %v531 = vpop.f32.mrb[0].mxu0
        %532 = vmatprep.mubr.bf16.mxu0 0
        %533 = vmatmul.mubr.bf16.gmra.mrb[0].mxu0 %v468
        %v534 = vpop.f32.mrb[0].mxu0
        %v535 = vadd.f32 0.0, %v534
        %v536 = vpop.f32.mrb[0].mxu0
        %v537 = vpop.f32.mrb[0].mxu0
        %v538 = vadd.f32 0.0, %v537
        %v539 = vpop.f32.mrb[0].mxu0
        %540 = vmatprep.mubr.bf16.mxu0 0
        %541 = vmatmul.mubr.bf16.gmra.mrb[0].mxu0 %v471
        %v542 = vpop.f32.mrb[0].mxu0
        %v543 = vadd.f32 0.0, %v542
        %v544 = vpop.f32.mrb[0].mxu0
        %v545 = vpop.f32.mrb[0].mxu0
        %v546 = vadd.f32 0.0, %v545
        %v547 = vpop.f32.mrb[0].mxu0
        %548 = vmatprep.mubr.bf16.mxu0 0
        %549 = vmatmul.mubr.bf16.gmra.mrb[0].mxu0 %v474
        %v550 = vpop.f32.mrb[0].mxu0
        %v551 = vadd.f32 0.0, %v550
        %v552 = vpop.f32.mrb[0].mxu0
        %v553 = vpop.f32.mrb[0].mxu0
        %v554 = vadd.f32 0.0, %v553
        %v555 = vpop.f32.mrb[0].mxu0
        %556 = vdwg.mxu0
        %v557 = vsel %vm457, %v511, -inf
        %v558 = vsel %vm457, %v514, -inf
        %v559 = vsel %vm457, %v519, -inf
        %v560 = vsel %vm457, %v522, -inf
        %v561 = vsel %vm457, %v527, -inf
        %v562 = vmax.f32 %v557, %v561
        %v563 = vsel %vm457, %v530, -inf
        %v564 = vmax.f32 %v558, %v563
        %v565 = vsel %vm457, %v535, -inf
        %v566 = vmax.f32 %v559, %v565
        %v567 = vsel %vm457, %v538, -inf
        %v568 = vmax.f32 %v560, %v567
        %v569 = vsel %vm457, %v543, -inf
        %v570 = vmax.f32 %v562, %v569
        %v571 = vsel %vm457, %v546, -inf
        %v572 = vmax.f32 %v564, %v571
        %v573 = vsel %vm457, %v551, -inf
        %v574 = vmax.f32 %v566, %v573
        %v575 = vsel %vm457, %v554, -inf
        %v576 = vmax.f32 %v568, %v575
        %v577 = vmax.f32 %v570, %v572
        %v578 = vmax.f32 %v574, %v576
        %v579 = vmax.f32 %v577, %v578
        %v580 = vld [vmem:[%s3] sm:$0x1]
        %v582 = vlaneseq
        %v583 = vshrl.u32 %v582, 7
        %v584 = vsub.s32 0, %v583
        %v585 = vrot.slane %v580, %v584
        %v587 = vadd.f32 %v579, %v585
        %v588 = vpack.c.bf16 %v587, %v587
        %v589 = vld [vmem:[#allocation8] sm:$0xf]
        %v590 = vld [vmem:[#allocation8 + $0x4] sm:$0xf]
        %v591 = vld [vmem:[#allocation8 + $0x8] sm:$0xf]
        %v592 = vld [vmem:[#allocation8 + $0xc] sm:$0xf]
        %v593 = vld [vmem:[#allocation8 + $0x10] sm:$0xf]
        %v594 = vld [vmem:[#allocation8 + $0x14] sm:$0xf]
        %v595 = vld [vmem:[#allocation8 + $0x18] sm:$0xf]
        %v596 = vld [vmem:[#allocation8 + $0x1c] sm:$0xf]
        %v597 = vld [vmem:[%s5] sm:$0x1]
        %v599 = vlaneseq
        %v600 = vshrl.u32 %v599, 7
        %v601 = vsub.s32 0, %v600
        %v602 = vrot.slane %v597, %v601
        %v612 = vunpack.c.l.b16 %v589
        %v613 = vunpack.c.l.b16 %v590
        %v614 = vunpack.c.l.b16 %v591
        %v615 = vunpack.c.l.b16 %v592
        %v616 = vunpack.c.l.b16 %v593
        %v617 = vunpack.c.l.b16 %v594
        %v618 = vunpack.c.l.b16 %v595
        %v619 = vunpack.c.l.b16 %v596
        %v620 = vpack.c.b16 %v613, %v612
        %v621 = vpack.c.b16 %v615, %v614
        %v622 = vpack.c.b16 %v617, %v616
        %v623 = vpack.c.b16 %v619, %v618
        %v629 = vsel %vm457, %v588, 0
        %631 = vmatprep.subr.bf16.mxu0 0
        %632 = vmatpush1.bf16.msra.mxu0 %v620
        %633 = vmatprep.subr.bf16.mxu0 0
        %634 = vmatpush1.bf16.msra.mxu0 %v621
        %635 = vmatprep.subr.bf16.mxu0 0
        %636 = vmatpush1.bf16.msra.mxu0 %v622
        %637 = vmatprep.subr.bf16.mxu0 0
        %638 = vmatpush1.bf16.msra.mxu0 %v623
        %639 = vmatprep.subr.bf16.mxu0 0
        %640 = vmatpush1.bf16.msra.mxu0 0
        %641 = vmatprep.subr.bf16.mxu0 0
        %642 = vmatpush1.bf16.msra.mxu0 0
        %643 = vmatprep.subr.bf16.mxu0 0
        %644 = vmatpush1.bf16.msra.mxu0 0
        %645 = vmatprep.subr.bf16.mxu0 0
        %646 = vmatpush1.bf16.msra.mxu0 0
        %647 = vmatprep.subr.bf16.mxu0 0
        %648 = vmatpush1.bf16.msra.mxu0 0
        %649 = vmatprep.subr.bf16.mxu0 0
        %650 = vmatpush1.bf16.msra.mxu0 0
        %651 = vmatprep.subr.bf16.mxu0 0
        %652 = vmatpush1.bf16.msra.mxu0 0
        %653 = vmatprep.subr.bf16.mxu0 0
        %654 = vmatpush1.bf16.msra.mxu0 0
        %655 = vmatprep.subr.bf16.mxu0 0
        %656 = vmatpush1.bf16.msra.mxu0 0
        %657 = vmatprep.subr.bf16.mxu0 0
        %658 = vmatpush1.bf16.msra.mxu0 0
        %659 = vmatprep.subr.bf16.mxu0 0
        %660 = vmatpush1.bf16.msra.mxu0 0
        %661 = vmatprep.subr.bf16.mxu0 0
        %662 = vmatpush1.bf16.msra.mxu0 0
        %663 = vmatprep.mubr.bf16.mxu0 0
        %664 = vmatmul.mubr.bf16.gmra.mrb[0].mxu0 %v629
        %v665 = vpop.f32.mrb[0].mxu0
        %v666 = vadd.f32 %v602, %v665
        %v667 = vpop.f32.mrb[0].mxu0
        %v668 = vpop.f32.mrb[0].mxu0
        %v669 = vpop.f32.mrb[0].mxu0
        %670 = vdwg.mxu0
        %671 = vst.msk [vmem:[%s356] sm:$0xff] %vm457, %v666
        %s672 = sand.u32 %s189, 1
        %s673 = scalar_lea.sflag [#allocation4], %s672
        %s674 = sand.u32 %s189, 1
        %s675 = smul.addr %s674, 8
        %s676 = scalar_lea.vmem [#allocation10], %s675
        // Predicated region
        $region61: #{tpu_custom_call.1} parent=43 // pred_check
          %p677 = pneg %p199
        $region62: #{tpu_custom_call.1} parent=43 // pred_check_branch
          %679 = sbr.rel (%p677) target = $region64
        $region63: #{tpu_custom_call.1} parent=43 // pred_region
          %s681 = ssub.s32 128, 128
          %682 = vsyncadd %s673, %s681
          %s683 = smul.addr %s31, 2
          %s684 = sadd.s32 %s32, %s683
          %s685 = smul.addr %s684, 128
          %s686 = scalar_lea.hbm %s6, %s685
          %s688 = sshll.u32 %s676, 4
          %s689 = int_to_ptr.vmem [resolvable:$true] %s688
          %691 = dma.vmem_to_hbm [thread:$0]  %s689, 128, %s686, %s673
        $region64: #{tpu_custom_call.1} parent=43 // pred_fallthru
          _
      $region44: #{tpu_custom_call.1} parent=5 // pred_fallthru
        _
      %p692 = scmp.le.s32.totalorder 2, %s22
      // Predicated region
      $region65: #{tpu_custom_call.1} parent=5 // pred_check
        %p693 = pneg %p692
      $region66: #{tpu_custom_call.1} parent=5 // pred_check_branch
        %695 = sbr.rel (%p693) target = $region68
      $region67: #{tpu_custom_call.1} parent=5 // pred_region
        %s696 = ssub.s32 %s22, 2
        // Predicated region
        $region69: #{tpu_custom_call.1} parent=67 // pred_check
          %p697 = pneg %p205
        $region70: #{tpu_custom_call.1} parent=67 // pred_check_branch
          %699 = sbr.rel (%p697) target = $region72
        $region71: #{tpu_custom_call.1} parent=67 // pred_region
          %s700 = sand.u32 %s190, 1
          %s701 = scalar_lea.sflag [#allocation4], %s700
          %s702 = sand.u32 %s190, 1
          %s703 = smul.addr %s702, 8
          %s704 = scalar_lea.vmem [#allocation10], %s703
          %705 = dma.done %s701, 128
        $region72: #{tpu_custom_call.1} parent=67 // pred_fallthru
          _
      $region68: #{tpu_custom_call.1} parent=5 // pred_fallthru
        _
    $region6: #{tpu_custom_call.1} parent=1 // loop_footer
      %s26 = sadd.s32 1, %s22
    $region7: #{tpu_custom_call.1} parent=1 // loop_footer_branch
      %21 = sbr.rel target = $region3
    $region8: #{tpu_custom_call.1} parent=1 // loop_exit
      _
    %706 = vsyncpa [#allocation3], 1
    %s707 = scalar_lea.sflag [#allocation3], 1
    %708 = vsyncpa %s707, 1
    %709 = vsyncpa [#allocation6], 1
    %s710 = scalar_lea.sflag [#allocation6], 1
    %711 = vsyncpa %s710, 1
    %712 = vsyncpa [#allocation9], 1
    %713 = vsyncpa [#allocation4], 1
    %s714 = scalar_lea.sflag [#allocation4], 1
    %715 = vsyncpa %s714, 1

</llo_original>
